<compile_context>
chip_gen: v7x
topology: tpu7x:2x2x1
jax: 0.10.0
libtpu: 0.0.40
codegen_flags: <defaults>
</compile_context>

<pallas_src>
import math

import jax
import jax.numpy as jnp
from jax.experimental import pallas as pl
from jax.experimental.pallas import tpu as pltpu


def make_pos_encoding(d_model: int, max_len: int) -> jnp.ndarray:
    """Deterministic sin/cos positional encoding table, shape (max_len, d_model)."""
    positions = jnp.arange(0, max_len, dtype=jnp.float32)[:, None]            # (max_len, 1)
    division_term = jnp.exp(
        jnp.arange(0, d_model, 2, dtype=jnp.float32) * (-math.log(10000.0) / d_model)
    )                                                                          # (d_model//2,)
    args = positions * division_term                                           # (max_len, d_model//2)
    pe = jnp.zeros((max_len, d_model), dtype=jnp.float32)
    pe = pe.at[:, 0::2].set(jnp.sin(args))
    pe = pe.at[:, 1::2].set(jnp.cos(args))
    return pe


def _pos_enc_add_kernel(x_ref, pe_ref, o_ref):
    # x_ref / pe_ref / o_ref all have the same 2-D block shape -> pure VPU add,
    # no broadcast, no size-1 leading axis.
    o_ref[...] = x_ref[...] + pe_ref[...]


# Per-buffer VMEM tile budget: 2 MiB f32 -> <= ~12 MiB with double buffering of
# 3 buffers, comfortably inside the 16 MiB default scope on v5e and well under
# v7x's 64 MiB physical VMEM.
_MAX_TILE_ROWS = (2 * 1024 * 1024) // (128 * 4)   # 4096 rows of 128 f32 lanes


def _choose_tile_rows(rows: int, max_rows: int = _MAX_TILE_ROWS) -> int:
    """Largest legal row-tile: full extent if it fits, else a multiple-of-8 divisor."""
    if rows <= max_rows:
        return rows  # full extent is always a legal block dim
    start = max_rows - (max_rows % 8)
    for cand in range(start, 7, -8):
        if rows % cand == 0:
            return cand
    return rows  # no legal divisor found; fall back to full extent


@jax.jit
def positional_encoding_forward(token_embedding: jnp.ndarray,
                                pos_encoding: jnp.ndarray) -> jnp.ndarray:
    """token_embedding: (B, S, D); pos_encoding: (max_len, D)."""
    b, seq_len, d_model = token_embedding.shape
    max_len = pos_encoding.shape[0]
    if seq_len > max_len:
        raise ValueError(f"seq_len={seq_len} exceeds max_len={max_len}")

    pe = pos_encoding[:seq_len, :].astype(token_embedding.dtype)
    n = seq_len * d_model

    compiler_params_common = dict(vmem_limit_bytes=32 * 1024 * 1024)

    if n % 128 == 0:
        # ---- lane-dense tiled path ------------------------------------------
        rows = n // 128
        tile_rows = _choose_tile_rows(rows)
        num_tiles = rows // tile_rows

        x_r = token_embedding.reshape(b, rows, 128)
        pe_r = pe.reshape(rows, 128)

        out = pl.pallas_call(
            _pos_enc_add_kernel,
            out_shape=jax.ShapeDtypeStruct((b, rows, 128), token_embedding.dtype),
            grid_spec=pltpu.PrefetchScalarGridSpec(
                num_scalar_prefetch=0,
                # batch innermost: pe block index depends only on `t`, so the pe
                # tile is NOT re-DMA'd for every batch element.
                grid=(num_tiles, b),
                in_specs=[
                    pl.BlockSpec((pl.Squeezed(), tile_rows, 128),
                                 lambda t, i: (i, t, 0)),
                    pl.BlockSpec((tile_rows, 128),
                                 lambda t, i: (t, 0)),
                ],
                out_specs=pl.BlockSpec((pl.Squeezed(), tile_rows, 128),
                                       lambda t, i: (i, t, 0)),
            ),
            compiler_params=pltpu.CompilerParams(
                dimension_semantics=("parallel", "parallel"),
                **compiler_params_common,
            ),
            input_output_aliases={0: 0},   # add in place on the x buffer
        )(x_r, pe_r)
        return out.reshape(b, seq_len, d_model)

    # ---- fallback path (S*D not a multiple of 128): full slab per batch ------
    # TODO(synk): could pad the feature dim to 128 instead of the whole-slab block.
    out = pl.pallas_call(
        _pos_enc_add_kernel,
        out_shape=jax.ShapeDtypeStruct((b, seq_len, d_model), token_embedding.dtype),
        grid_spec=pltpu.PrefetchScalarGridSpec(
            num_scalar_prefetch=0,
            grid=(b,),
            in_specs=[
                pl.BlockSpec((pl.Squeezed(), seq_len, d_model), lambda i: (i, 0, 0)),
                pl.BlockSpec((seq_len, d_model), lambda i: (0, 0)),
            ],
            out_specs=pl.BlockSpec((pl.Squeezed(), seq_len, d_model), lambda i: (i, 0, 0)),
        ),
        compiler_params=pltpu.CompilerParams(
            dimension_semantics=("parallel",),
            **compiler_params_common,
        ),
        input_output_aliases={0: 0},
    )(token_embedding, pe)
    return out


if __name__ == "__main__":
    # Small shapes consistent with the module: d_model=32, max_len=16,
    # batch=2, seq_len=8 (<= max_len).
    d_model = 32
    max_len = 16
    batch = 2
    seq_len = 8

    key = jax.random.PRNGKey(0)
    token_embedding = jax.random.normal(key, (batch, seq_len, d_model), dtype=jnp.float32)

    pos_encoding = make_pos_encoding(d_model, max_len)

    out = positional_encoding_forward(token_embedding, pos_encoding)
    out = jax.block_until_ready(out)

    # Reference check (pure JAX), mirrors the PyTorch forward exactly.
    ref = token_embedding + pos_encoding[None, :seq_len, :]
    assert out.shape == (batch, seq_len, d_model)
    assert jnp.allclose(out, ref, atol=1e-6, rtol=1e-6)

    print("KERNEL_OK")
</pallas_src>

<mosaic_0001>
module attributes {stable_mosaic.version = 11 : i64} {
  func.func @_pos_enc_add_kernel(%arg0: i32, %arg1: i32, %arg2: memref<1x2x128xf32, #tpu.memory_space<vmem>>, %arg3: memref<2x128xf32, #tpu.memory_space<vmem>>, %arg4: memref<1x2x128xf32, #tpu.memory_space<vmem>>) attributes {dimension_semantics = [#tpu.dimension_semantics<parallel>, #tpu.dimension_semantics<parallel>], iteration_bounds = array<i64: 1, 2>, scalar_prefetch = 0 : i64, scratch_operands = 0 : i64, tpu.core_type = #tpu.core_type<tc>, window_params = [{transform_indices = @transform_0, window_bounds = array<i64: 1, 2, 128>}, {transform_indices = @transform_1, window_bounds = array<i64: 2, 128>}, {transform_indices = @transform_2, window_bounds = array<i64: 1, 2, 128>}]} {
    %c0 = arith.constant 0 : index
    %c0_0 = arith.constant 0 : index
    %c0_1 = arith.constant 0 : index
    %0 = vector.load %arg2[%c0, %c0_0, %c0_1] : memref<1x2x128xf32, #tpu.memory_space<vmem>>, vector<1x2x128xf32>
    %1 = vector.shape_cast %0 : vector<1x2x128xf32> to vector<2x128xf32>
    %c0_2 = arith.constant 0 : index
    %c0_3 = arith.constant 0 : index
    %2 = vector.load %arg3[%c0_2, %c0_3] : memref<2x128xf32, #tpu.memory_space<vmem>>, vector<2x128xf32>
    %3 = arith.addf %1, %2 : vector<2x128xf32>
    %c0_4 = arith.constant 0 : index
    %c0_5 = arith.constant 0 : index
    %c0_6 = arith.constant 0 : index
    %4 = vector.load %arg4[%c0_4, %c0_5, %c0_6] : memref<1x2x128xf32, #tpu.memory_space<vmem>>, vector<1x2x128xf32>
    %5 = vector.shape_cast %4 : vector<1x2x128xf32> to vector<2x128xf32>
    %6 = vector.shape_cast %3 : vector<2x128xf32> to vector<1x2x128xf32>
    tpu.vector_store %arg4[%c0_4, %c0_5, %c0_6], %6 {strides = array<i32>} : memref<1x2x128xf32, #tpu.memory_space<vmem>>, vector<1x2x128xf32>,
    return
  }
  func.func @transform_0(%arg0: i32, %arg1: i32) -> (i32, i32, i32) {
    %c0_i32 = arith.constant 0 : i32
    %c0_i32_0 = arith.constant 0 : i32
    return %arg1, %arg0, %c0_i32 : i32, i32, i32
  }
  func.func @transform_1(%arg0: i32, %arg1: i32) -> (i32, i32) {
    %c0_i32 = arith.constant 0 : i32
    %c0_i32_0 = arith.constant 0 : i32
    return %arg0, %c0_i32 : i32, i32
  }
  func.func @transform_2(%arg0: i32, %arg1: i32) -> (i32, i32, i32) {
    %c0_i32 = arith.constant 0 : i32
    %c0_i32_0 = arith.constant 0 : i32
    return %arg1, %arg0, %c0_i32 : i32, i32, i32
  }
}

</mosaic_0001>

<llo_original>
// kernel: positional_encoding_forward.1
$region0: #{positional_encoding_forward.1}
  #allocation0 [shape = 'u32[]', space=smem, size = 0x4, offset = 0x4, fixed_abs, tag = 'smem constant byte address 0x4 - core index']
  #allocation1 [shape = 'u32[144,128]{1,0:T(1,128)}', space=vmem, size = 0x12000, scoped, tag = 'internal scratch']
  %s0 = inlined_call_operand.vmem [shape: f32[2,2,128], index: 0, kind: input, shape index: {}, may-alias: {0,2}]
  %s1 = inlined_call_operand.vmem [shape: f32[2,128], index: 1, kind: input, shape index: {}]
  %s2 = inlined_call_operand.vmem [shape: f32[2,2,128], index: 2, kind: output, shape index: {}, may-alias: {0,2}]
  %s3 = sld [smem:[#allocation0]]
  $region41: #{positional_encoding_forward.1} parent=0
    _
  %s5 = ssub.s32 1, %s3
  %s6 = scalar_select 0, %s5, %s3
  loop: start=0, step=1, limit=4
  $region2: #{positional_encoding_forward.1} parent=0 // loop_pre_header
    _
  $region3: #{positional_encoding_forward.1} parent=0 // loop_header
    %s8 = sphi 0, %s12
    %p9 = scmp.ge.s32.totalorder %s8, 4
    %s15 = sphi 0, %s27
    %s16 = sphi 0, %s23
    %s17 = sphi 0, %s15
    %s18 = sphi 0, %s16
    %s19 = sphi 0, %s17
    %s20 = sphi 0, %s18
    %s32 = sphi 0, %s34
    %s35 = sphi 0, %s32
    %s36 = sphi 0, %s35
    %s52 = sphi 0, %s36
    %s58 = sphi 0, %s60
    %s61 = sphi 0, %s58
    %s62 = sphi 0, %s61
    %s78 = sphi 0, %s62
    %s86 = sphi 0, %s88
    %s89 = sphi 0, %s86
    %s90 = sphi 0, %s89
    %s106 = sphi 0, %s90
  $region4: #{positional_encoding_forward.1} parent=0 // loop_header_branch
    %11 = sbr.rel (%p9) target = $region8
  $region5: #{positional_encoding_forward.1} parent=0 // loop_body
    %s13 = ssub.s32 %s8, 1
    %s14 = ssub.s32 %s8, 2
    %s21 = sadd.s32 1, %s16
    %p22 = scmp.ge.s32.totalorder %s21, 2
    %s23 = scalar_select %p22, 0, %s21
    %s24 = sadd.s32 1, %s15
    %s25 = scalar_select %p22, %s24, %s15
    %p26 = scmp.ge.s32.totalorder %s25, 1
    %s27 = scalar_select %p26, 0, %s25
    %s28 = ssub.s32 %s16, %s23
    %s29 = ssub.s32 %s15, %s27
    %s30 = sor.u32 %s28, %s29
    %p31 = scmp.eq.s32.totalorder %s30, 0
    %s33 = sadd.s32 %s32, 1
    %s34 = scalar_select %p31, %s32, %s33
    %p37 = pneg %p31
    %p38 = scmp.eq.s32.totalorder %s8, 1
    %p39 = por %p37, %p38
    %p40 = scmp.ne.s32.totalorder %s32, %s35
    %p41 = scmp.eq.s32.totalorder %s8, 0
    %p42 = por %p40, %p41
    %p43 = scmp.ne.s32.totalorder %s32, %s35
    %p44 = scmp.eq.s32.totalorder %s13, 1
    %p45 = por %p43, %p44
    %p46 = scmp.ne.s32.totalorder %s35, %s36
    %p47 = scmp.eq.s32.totalorder %s13, 0
    %p48 = por %p46, %p47
    %p49 = scmp.ne.s32.totalorder %s35, %s36
    %p50 = scmp.eq.s32.totalorder %s14, 1
    %p51 = por %p49, %p50
    %p53 = scmp.ne.s32.totalorder %s36, %s52
    %p54 = scmp.eq.s32.totalorder %s14, 0
    %p55 = por %p53, %p54
    %s56 = ssub.s32 %s15, %s27
    %p57 = scmp.eq.s32.totalorder %s56, 0
    %s59 = sadd.s32 %s58, 1
    %s60 = scalar_select %p57, %s58, %s59
    %p63 = pneg %p57
    %p64 = scmp.eq.s32.totalorder %s8, 1
    %p65 = por %p63, %p64
    %p66 = scmp.ne.s32.totalorder %s58, %s61
    %p67 = scmp.eq.s32.totalorder %s8, 0
    %p68 = por %p66, %p67
    %p69 = scmp.ne.s32.totalorder %s58, %s61
    %p70 = scmp.eq.s32.totalorder %s13, 1
    %p71 = por %p69, %p70
    %p72 = scmp.ne.s32.totalorder %s61, %s62
    %p73 = scmp.eq.s32.totalorder %s13, 0
    %p74 = por %p72, %p73
    %p75 = scmp.ne.s32.totalorder %s61, %s62
    %p76 = scmp.eq.s32.totalorder %s14, 1
    %p77 = por %p75, %p76
    %p79 = scmp.ne.s32.totalorder %s62, %s78
    %p80 = scmp.eq.s32.totalorder %s14, 0
    %p81 = por %p79, %p80
    %s82 = ssub.s32 %s16, %s23
    %s83 = ssub.s32 %s15, %s27
    %s84 = sor.u32 %s82, %s83
    %p85 = scmp.eq.s32.totalorder %s84, 0
    %s87 = sadd.s32 %s86, 1
    %s88 = scalar_select %p85, %s86, %s87
    %p91 = pneg %p85
    %p92 = scmp.eq.s32.totalorder %s8, 1
    %p93 = por %p91, %p92
    %p94 = scmp.ne.s32.totalorder %s86, %s89
    %p95 = scmp.eq.s32.totalorder %s8, 0
    %p96 = por %p94, %p95
    %p97 = scmp.ne.s32.totalorder %s86, %s89
    %p98 = scmp.eq.s32.totalorder %s13, 1
    %p99 = por %p97, %p98
    %p100 = scmp.ne.s32.totalorder %s89, %s90
    %p101 = scmp.eq.s32.totalorder %s13, 0
    %p102 = por %p100, %p101
    %p103 = scmp.ne.s32.totalorder %s89, %s90
    %p104 = scmp.eq.s32.totalorder %s14, 1
    %p105 = por %p103, %p104
    %p107 = scmp.ne.s32.totalorder %s90, %s106
    %p108 = scmp.eq.s32.totalorder %s14, 0
    %p109 = por %p107, %p108
    %p110 = scmp.le.s32.totalorder 1, %s8
    %p111 = scmp.lt.s32.totalorder %s8, 3
    %p112 = pnand %p110, %p111
    %p113 = pneg %p112
    // Predicated region
    $region9: #{positional_encoding_forward.1} parent=5 // pred_check
      _
    $region10: #{positional_encoding_forward.1} parent=5 // pred_check_branch
      %115 = sbr.rel (%p112) target = $region12
    $region11: #{positional_encoding_forward.1} parent=5 // pred_region
      %s116 = ssub.s32 %s8, 1
      // Predicated region
      $region13: #{positional_encoding_forward.1} parent=11 // pred_check
        %p117 = pneg %p74
      $region14: #{positional_encoding_forward.1} parent=11 // pred_check_branch
        %119 = sbr.rel (%p117) target = $region16
      $region15: #{positional_encoding_forward.1} parent=11 // pred_region
        %p120 = scmp.lt.s32.totalorder %s17, 0
        %s121 = scalar_select %p120, %s17, 0
        %s122 = smul.addr %s121, 2
        %s123 = scalar_lea.vmem %s1, %s122
      $region16: #{positional_encoding_forward.1} parent=11 // pred_fallthru
        _
    $region12: #{positional_encoding_forward.1} parent=5 // pred_fallthru
      _
    %p124 = scmp.lt.s32.totalorder %s8, 2
    // Predicated region
    $region17: #{positional_encoding_forward.1} parent=5 // pred_check
      %p125 = pneg %p124
    $region18: #{positional_encoding_forward.1} parent=5 // pred_check_branch
      %127 = sbr.rel (%p125) target = $region20
    $region19: #{positional_encoding_forward.1} parent=5 // pred_region
      // Predicated region
      $region21: #{positional_encoding_forward.1} parent=19 // pred_check
        %p128 = pneg %p42
      $region22: #{positional_encoding_forward.1} parent=19 // pred_check_branch
        %130 = sbr.rel (%p128) target = $region24
      $region23: #{positional_encoding_forward.1} parent=19 // pred_region
        %p131 = scmp.lt.s32.totalorder %s16, 1
        %s132 = scalar_select %p131, %s16, 1
        %p133 = scmp.lt.s32.totalorder %s15, 0
        %s134 = scalar_select %p133, %s15, 0
        %s135 = sadd.s32 %s134, %s132
        %s136 = smul.addr %s135, 2
        %s137 = scalar_lea.vmem %s0, %s136
      $region24: #{positional_encoding_forward.1} parent=19 // pred_fallthru
        _
    $region20: #{positional_encoding_forward.1} parent=5 // pred_fallthru
      _
    %p138 = scmp.le.s32.totalorder 1, %s8
    %p139 = scmp.lt.s32.totalorder %s8, 3
    %p140 = pnand %p138, %p139
    %p141 = pneg %p140
    // Predicated region
    $region25: #{positional_encoding_forward.1} parent=5 // pred_check
      _
    $region26: #{positional_encoding_forward.1} parent=5 // pred_check_branch
      %143 = sbr.rel (%p140) target = $region28
    $region27: #{positional_encoding_forward.1} parent=5 // pred_region
      %s144 = ssub.s32 %s8, 1
      %p145 = scmp.lt.s32.totalorder %s18, 1
      %s146 = scalar_select %p145, %s18, 1
      %p147 = scmp.lt.s32.totalorder %s17, 0
      %s148 = scalar_select %p147, %s17, 0
      %s149 = sadd.s32 %s148, %s146
      %s150 = smul.addr %s149, 2
      %s151 = scalar_lea.vmem %s0, %s150
      %p152 = pneg %p48
      %p153 = pneg %p45
      %p154 = scmp.lt.s32.totalorder %s17, 0
      %s155 = scalar_select %p154, %s17, 0
      %s156 = smul.addr %s155, 2
      %s157 = scalar_lea.vmem %s1, %s156
      %p158 = pneg %p74
      %p159 = pneg %p71
      %p160 = pneg %p102
      %p161 = pneg %p99
      %p162 = scmp.lt.s32.totalorder %s18, 1
      %s163 = scalar_select %p162, %s18, 1
      %p164 = scmp.lt.s32.totalorder %s17, 0
      %s165 = scalar_select %p164, %s17, 0
      %s166 = sadd.s32 %s165, %s163
      %s167 = smul.addr %s166, 2
      %s168 = scalar_lea.vmem %s2, %s167
      %p169 = scmp.lt.s32.totalorder %s18, 1
      %s170 = scalar_select %p169, %s18, 1
      %p171 = scmp.lt.s32.totalorder %s17, 0
      %s172 = scalar_select %p171, %s17, 0
      %s173 = sadd.s32 %s172, %s170
      %s174 = smul.addr %s173, 2
      %s175 = scalar_lea.vmem %s0, %s174
      %p176 = scmp.lt.s32.totalorder %s17, 0
      %s177 = scalar_select %p176, %s17, 0
      %s178 = smul.addr %s177, 2
      %s179 = scalar_lea.vmem %s1, %s178
      %p180 = scmp.lt.s32.totalorder %s18, 1
      %s181 = scalar_select %p180, %s18, 1
      %p182 = scmp.lt.s32.totalorder %s17, 0
      %s183 = scalar_select %p182, %s17, 0
      %s184 = sadd.s32 %s183, %s181
      %s185 = smul.addr %s184, 2
      %s186 = scalar_lea.vmem %s2, %s185
      %v187 = vld [vmem:[%s175] sm:$0x3]
      %v188 = vld [vmem:[%s179] sm:$0x3]
      %v189 = vadd.f32 %v187, %v188
      %190 = vst [vmem:[%s186] sm:$0x3] %v189
      %p191 = scmp.lt.s32.totalorder %s18, 1
      %s192 = scalar_select %p191, %s18, 1
      %p193 = scmp.lt.s32.totalorder %s17, 0
      %s194 = scalar_select %p193, %s17, 0
      %s195 = sadd.s32 %s194, %s192
      %s196 = smul.addr %s195, 2
      %s197 = scalar_lea.vmem %s2, %s196
      // Predicated region
      $region29: #{positional_encoding_forward.1} parent=27 // pred_check
        %p198 = pneg %p99
      $region30: #{positional_encoding_forward.1} parent=27 // pred_check_branch
        %200 = sbr.rel (%p198) target = $region32
      $region31: #{positional_encoding_forward.1} parent=27 // pred_region
        _
      $region32: #{positional_encoding_forward.1} parent=27 // pred_fallthru
        _
    $region28: #{positional_encoding_forward.1} parent=5 // pred_fallthru
      _
    %p201 = scmp.le.s32.totalorder 2, %s8
    // Predicated region
    $region33: #{positional_encoding_forward.1} parent=5 // pred_check
      %p202 = pneg %p201
    $region34: #{positional_encoding_forward.1} parent=5 // pred_check_branch
      %204 = sbr.rel (%p202) target = $region36
    $region35: #{positional_encoding_forward.1} parent=5 // pred_region
      %s205 = ssub.s32 %s8, 2
      // Predicated region
      $region37: #{positional_encoding_forward.1} parent=35 // pred_check
        %p206 = pneg %p105
      $region38: #{positional_encoding_forward.1} parent=35 // pred_check_branch
        %208 = sbr.rel (%p206) target = $region40
      $region39: #{positional_encoding_forward.1} parent=35 // pred_region
        %p209 = scmp.lt.s32.totalorder %s20, 1
        %s210 = scalar_select %p209, %s20, 1
        %p211 = scmp.lt.s32.totalorder %s19, 0
        %s212 = scalar_select %p211, %s19, 0
        %s213 = sadd.s32 %s212, %s210
        %s214 = smul.addr %s213, 2
        %s215 = scalar_lea.vmem %s2, %s214
      $region40: #{positional_encoding_forward.1} parent=35 // pred_fallthru
        _
    $region36: #{positional_encoding_forward.1} parent=5 // pred_fallthru
      _
  $region6: #{positional_encoding_forward.1} parent=0 // loop_footer
    %s12 = sadd.s32 1, %s8
  $region7: #{positional_encoding_forward.1} parent=0 // loop_footer_branch
    %7 = sbr.rel target = $region3
  $region8: #{positional_encoding_forward.1} parent=0 // loop_exit
    _

</llo_original>
